<compile_context>
chip_gen: v5e
topology: v5e:2x2
jax: 0.10.0
libtpu: 0.0.40
codegen_flags: <defaults>
</compile_context>

<pallas_src>
import jax
import jax.numpy as jnp
from jax.experimental import pallas as pl
from jax.experimental.pallas import tpu as pltpu


HIDDEN = 512    # fixed by the module
CHUNK = 128     # hidden-chunk width for the fused fc1/ReLU/head loop
TB_MAX = 2048   # max batch tile; with chunked fusion VMEM stays tiny on all gens


def _round_up(n, m):
    return ((n + m - 1) // m) * m


def critic_kernel(x_ref, w1_ref, b1_ref, w2t_ref, b2_ref, o_ref):
    x = x_ref[...]                                   # (tb, num_state) f32
    tb = x.shape[0]
    acc = jnp.zeros((tb, 1), dtype=jnp.float32)
    # Fused fc1 + ReLU + value head over 128-wide hidden chunks.  ReLU and the
    # head are elementwise per hidden unit, so chunking is numerically
    # identical to materializing the full (tb, 512) activation — it just never
    # writes it out (kills the dominant vld/vst traffic).
    for c in range(HIDDEN // CHUNK):                 # static 4-iteration unroll
        lo = c * CHUNK
        h = jnp.dot(x, w1_ref[:, lo:lo + CHUNK],
                    preferred_element_type=jnp.float32)         # MXU, (tb, 128)
        h = jnp.maximum(h + b1_ref[:, lo:lo + CHUNK], 0.0)       # VPU
        acc = acc + jnp.sum(h * w2t_ref[:, lo:lo + CHUNK],
                            axis=-1, keepdims=True)              # VPU + XLU
    v = acc + b2_ref[0]                              # (tb, 1), scalar bias (SMEM)
    # Lane-dense store: (tb, 1) -> (1, tb) so the writeback is an unmasked,
    # contiguous vst instead of one valid lane per sublane.
    o_ref[...] = jnp.transpose(v).astype(o_ref.dtype)


def prepare_critic_params(w1, b1, w2, b2):
    """One-time (per optimizer step) re-layout of the Critic parameters."""
    w1_k = w1.astype(jnp.float32)                       # (num_state, 512)
    b1_row = b1.reshape(1, HIDDEN).astype(jnp.float32)  # (1, 512)
    w2t = jnp.transpose(w2).astype(jnp.float32)         # (1, 512), lane-dense
    b2_s = b2.reshape(1).astype(jnp.float32)            # (1,) scalar -> SMEM
    return w1_k, b1_row, w2t, b2_s


def critic_forward(x, prepared_params):
    w1, b1_row, w2t, b2_s = prepared_params
    B, num_state = x.shape
    assert w1.shape == (num_state, HIDDEN)
    assert b1_row.shape == (1, HIDDEN)
    assert w2t.shape == (1, HIDDEN)
    assert b2_s.shape == (1,)

    # Batch tile selection:
    #   * small B: a single f32-sublane-aligned tile (fewest grid steps).
    #   * B >= 256: at least 2 tiles so the "parallel" axis can shard across
    #     both TensorCores on v7x; capped at TB_MAX.
    if B >= 256:
        tb = min(TB_MAX, _round_up(-(-B // 2), 8))
    else:
        tb = _round_up(max(B, 8), 8)
    b_pad = _round_up(B, tb)
    if b_pad != B:
        x = jnp.pad(x, ((0, b_pad - B), (0, 0)))
    n_tiles = b_pad // tb

    cost = pl.CostEstimate(
        flops=2 * b_pad * num_state * HIDDEN + 4 * b_pad * HIDDEN,
        transcendentals=0,
        bytes_accessed=(b_pad * num_state * 4 + w1.size * 4
                        + b1_row.size * 4 + w2t.size * 4 + b_pad * 4),
    )

    out = pl.pallas_call(
        critic_kernel,
        out_shape=jax.ShapeDtypeStruct((n_tiles, 1, tb), jnp.float32),
        grid=(n_tiles,),
        in_specs=[
            pl.BlockSpec((tb, num_state), lambda i: (i, 0)),       # x tile (pipelined)
            pl.BlockSpec((num_state, HIDDEN), lambda i: (0, 0)),   # w1 resident
            pl.BlockSpec((1, HIDDEN), lambda i: (0, 0)),           # b1 resident
            pl.BlockSpec((1, HIDDEN), lambda i: (0, 0)),           # w2^T resident
            pl.BlockSpec(memory_space=pltpu.MemorySpace.SMEM),     # b2 scalar
        ],
        out_specs=pl.BlockSpec((None, 1, tb), lambda i: (i, 0, 0)),  # lane-dense row
        compiler_params=pltpu.CompilerParams(
            dimension_semantics=("parallel",)),
        cost_estimate=cost,
    )(x, w1, b1_row, w2t, b2_s)

    # (n_tiles, 1, tb) row-major == batch order; padded rows hold garbage, so
    # the [:B] slice must stay.
    return out.reshape(b_pad, 1)[:B]


def init_params(key, num_state):
    # Deterministic init mimicking nn.Linear's U(-1/sqrt(fan_in), 1/sqrt(fan_in)).
    k1, k2, k3, k4 = jax.random.split(key, 4)
    lim1 = 1.0 / jnp.sqrt(num_state)
    lim2 = 1.0 / jnp.sqrt(HIDDEN)
    w1 = jax.random.uniform(k1, (num_state, HIDDEN), jnp.float32, -lim1, lim1)
    b1 = jax.random.uniform(k2, (HIDDEN,), jnp.float32, -lim1, lim1)
    w2 = jax.random.uniform(k3, (HIDDEN, 1), jnp.float32, -lim2, lim2)
    b2 = jax.random.uniform(k4, (1,), jnp.float32, -lim2, lim2)
    return w1, b1, w2, b2


if __name__ == "__main__":
    key = jax.random.PRNGKey(0)
    kx, kp = jax.random.split(key)

    batch = 8
    num_state = 16     # small, consistent with a discrete-control state vector
    num_action = 4     # unused in forward (only stored in __init__)

    x = jax.random.normal(kx, (batch, num_state), dtype=jnp.float32)
    w1, b1, w2, b2 = init_params(kp, num_state)

    prepared = prepare_critic_params(w1, b1, w2, b2)   # one-time weight prep
    value = jax.block_until_ready(critic_forward(x, prepared))

    # Pure-JAX f32 reference of the PyTorch forward.
    ref = jnp.maximum(x @ w1 + b1, 0.0) @ w2 + b2
    assert value.shape == (batch, 1)
    assert jnp.allclose(value, ref, atol=5e-3, rtol=5e-3)

    print("KERNEL_OK")
</pallas_src>

<mosaic_0001>
module attributes {stable_mosaic.version = 11 : i64} {
  func.func @critic_kernel(%arg0: i32, %arg1: memref<8x16xf32, #tpu.memory_space<vmem>>, %arg2: memref<16x512xf32, #tpu.memory_space<vmem>>, %arg3: memref<1x512xf32, #tpu.memory_space<vmem>>, %arg4: memref<1x512xf32, #tpu.memory_space<vmem>>, %arg5: memref<1xf32, #tpu.memory_space<smem>>, %arg6: memref<1x1x8xf32, #tpu.memory_space<vmem>>) attributes {dimension_semantics = [#tpu.dimension_semantics<parallel>], iteration_bounds = array<i64: 1>, scalar_prefetch = 0 : i64, scratch_operands = 0 : i64, tpu.core_type = #tpu.core_type<tc>, window_params = [{transform_indices = @transform_0, window_bounds = array<i64: 8, 16>}, {pipeline_mode = #tpu.pipeline_mode<synchronous>, transform_indices = @transform_1, window_bounds = array<i64: 16, 512>}, {pipeline_mode = #tpu.pipeline_mode<synchronous>, transform_indices = @transform_2, window_bounds = array<i64: 1, 512>}, {pipeline_mode = #tpu.pipeline_mode<synchronous>, transform_indices = @transform_3, window_bounds = array<i64: 1, 512>}, {transform_indices = @transform_4, window_bounds = array<i64: 1>}, {transform_indices = @transform_5, window_bounds = array<i64: 1, 1, 8>}]} {
    %c0 = arith.constant 0 : index
    %c0_0 = arith.constant 0 : index
    %0 = vector.load %arg1[%c0, %c0_0] : memref<8x16xf32, #tpu.memory_space<vmem>>, vector<8x16xf32>
    %cst = arith.constant 0.000000e+00 : f32
    %1 = vector.broadcast %cst : f32 to vector<8x1xf32>
    %c0_1 = arith.constant 0 : index
    %c0_2 = arith.constant 0 : index
    %2 = vector.load %arg2[%c0_1, %c0_2] : memref<16x512xf32, #tpu.memory_space<vmem>>, vector<16x128xf32>
    %cst_3 = arith.constant dense<0.000000e+00> : vector<8x128xf32>
    %3 = tpu.matmul %0, %2, %cst_3 {dimension_numbers = #tpu.dot_dimension_numbers<[1], [0], [0], [1], [0, 0, 1, 1], [], []>} : vector<8x16xf32>, vector<16x128xf32>, vector<8x128xf32> -> vector<8x128xf32>
    %c0_4 = arith.constant 0 : index
    %c0_5 = arith.constant 0 : index
    %4 = vector.load %arg3[%c0_4, %c0_5] : memref<1x512xf32, #tpu.memory_space<vmem>>, vector<1x128xf32>
    %5 = vector.broadcast %4 : vector<1x128xf32> to vector<8x128xf32>
    %6 = arith.addf %3, %5 : vector<8x128xf32>
    %cst_6 = arith.constant 0.000000e+00 : f32
    %7 = vector.broadcast %cst_6 : f32 to vector<8x128xf32>
    %8 = arith.maximumf %6, %7 : vector<8x128xf32>
    %c0_7 = arith.constant 0 : index
    %c0_8 = arith.constant 0 : index
    %9 = vector.load %arg4[%c0_7, %c0_8] : memref<1x512xf32, #tpu.memory_space<vmem>>, vector<1x128xf32>
    %10 = vector.broadcast %9 : vector<1x128xf32> to vector<8x128xf32>
    %11 = arith.mulf %8, %10 : vector<8x128xf32>
    %cst_9 = arith.constant dense<0.000000e+00> : vector<8xf32>
    %12 = vector.multi_reduction <add>, %11, %cst_9 [1] : vector<8x128xf32> to vector<8xf32>
    %13 = vector.shape_cast %12 : vector<8xf32> to vector<8x1xf32>
    %14 = arith.addf %1, %13 : vector<8x1xf32>
    %c0_10 = arith.constant 0 : index
    %c128 = arith.constant 128 : index
    %15 = vector.load %arg2[%c0_10, %c128] : memref<16x512xf32, #tpu.memory_space<vmem>>, vector<16x128xf32>
    %cst_11 = arith.constant dense<0.000000e+00> : vector<8x128xf32>
    %16 = tpu.matmul %0, %15, %cst_11 {dimension_numbers = #tpu.dot_dimension_numbers<[1], [0], [0], [1], [0, 0, 1, 1], [], []>} : vector<8x16xf32>, vector<16x128xf32>, vector<8x128xf32> -> vector<8x128xf32>
    %c0_12 = arith.constant 0 : index
    %c128_13 = arith.constant 128 : index
    %17 = vector.load %arg3[%c0_12, %c128_13] : memref<1x512xf32, #tpu.memory_space<vmem>>, vector<1x128xf32>
    %18 = vector.broadcast %17 : vector<1x128xf32> to vector<8x128xf32>
    %19 = arith.addf %16, %18 : vector<8x128xf32>
    %cst_14 = arith.constant 0.000000e+00 : f32
    %20 = vector.broadcast %cst_14 : f32 to vector<8x128xf32>
    %21 = arith.maximumf %19, %20 : vector<8x128xf32>
    %c0_15 = arith.constant 0 : index
    %c128_16 = arith.constant 128 : index
    %22 = vector.load %arg4[%c0_15, %c128_16] : memref<1x512xf32, #tpu.memory_space<vmem>>, vector<1x128xf32>
    %23 = vector.broadcast %22 : vector<1x128xf32> to vector<8x128xf32>
    %24 = arith.mulf %21, %23 : vector<8x128xf32>
    %cst_17 = arith.constant dense<0.000000e+00> : vector<8xf32>
    %25 = vector.multi_reduction <add>, %24, %cst_17 [1] : vector<8x128xf32> to vector<8xf32>
    %26 = vector.shape_cast %25 : vector<8xf32> to vector<8x1xf32>
    %27 = arith.addf %14, %26 : vector<8x1xf32>
    %c0_18 = arith.constant 0 : index
    %c256 = arith.constant 256 : index
    %28 = vector.load %arg2[%c0_18, %c256] : memref<16x512xf32, #tpu.memory_space<vmem>>, vector<16x128xf32>
    %cst_19 = arith.constant dense<0.000000e+00> : vector<8x128xf32>
    %29 = tpu.matmul %0, %28, %cst_19 {dimension_numbers = #tpu.dot_dimension_numbers<[1], [0], [0], [1], [0, 0, 1, 1], [], []>} : vector<8x16xf32>, vector<16x128xf32>, vector<8x128xf32> -> vector<8x128xf32>
    %c0_20 = arith.constant 0 : index
    %c256_21 = arith.constant 256 : index
    %30 = vector.load %arg3[%c0_20, %c256_21] : memref<1x512xf32, #tpu.memory_space<vmem>>, vector<1x128xf32>
    %31 = vector.broadcast %30 : vector<1x128xf32> to vector<8x128xf32>
    %32 = arith.addf %29, %31 : vector<8x128xf32>
    %cst_22 = arith.constant 0.000000e+00 : f32
    %33 = vector.broadcast %cst_22 : f32 to vector<8x128xf32>
    %34 = arith.maximumf %32, %33 : vector<8x128xf32>
    %c0_23 = arith.constant 0 : index
    %c256_24 = arith.constant 256 : index
    %35 = vector.load %arg4[%c0_23, %c256_24] : memref<1x512xf32, #tpu.memory_space<vmem>>, vector<1x128xf32>
    %36 = vector.broadcast %35 : vector<1x128xf32> to vector<8x128xf32>
    %37 = arith.mulf %34, %36 : vector<8x128xf32>
    %cst_25 = arith.constant dense<0.000000e+00> : vector<8xf32>
    %38 = vector.multi_reduction <add>, %37, %cst_25 [1] : vector<8x128xf32> to vector<8xf32>
    %39 = vector.shape_cast %38 : vector<8xf32> to vector<8x1xf32>
    %40 = arith.addf %27, %39 : vector<8x1xf32>
    %c0_26 = arith.constant 0 : index
    %c384 = arith.constant 384 : index
    %41 = vector.load %arg2[%c0_26, %c384] : memref<16x512xf32, #tpu.memory_space<vmem>>, vector<16x128xf32>
    %cst_27 = arith.constant dense<0.000000e+00> : vector<8x128xf32>
    %42 = tpu.matmul %0, %41, %cst_27 {dimension_numbers = #tpu.dot_dimension_numbers<[1], [0], [0], [1], [0, 0, 1, 1], [], []>} : vector<8x16xf32>, vector<16x128xf32>, vector<8x128xf32> -> vector<8x128xf32>
    %c0_28 = arith.constant 0 : index
    %c384_29 = arith.constant 384 : index
    %43 = vector.load %arg3[%c0_28, %c384_29] : memref<1x512xf32, #tpu.memory_space<vmem>>, vector<1x128xf32>
    %44 = vector.broadcast %43 : vector<1x128xf32> to vector<8x128xf32>
    %45 = arith.addf %42, %44 : vector<8x128xf32>
    %cst_30 = arith.constant 0.000000e+00 : f32
    %46 = vector.broadcast %cst_30 : f32 to vector<8x128xf32>
    %47 = arith.maximumf %45, %46 : vector<8x128xf32>
    %c0_31 = arith.constant 0 : index
    %c384_32 = arith.constant 384 : index
    %48 = vector.load %arg4[%c0_31, %c384_32] : memref<1x512xf32, #tpu.memory_space<vmem>>, vector<1x128xf32>
    %49 = vector.broadcast %48 : vector<1x128xf32> to vector<8x128xf32>
    %50 = arith.mulf %47, %49 : vector<8x128xf32>
    %cst_33 = arith.constant dense<0.000000e+00> : vector<8xf32>
    %51 = vector.multi_reduction <add>, %50, %cst_33 [1] : vector<8x128xf32> to vector<8xf32>
    %52 = vector.shape_cast %51 : vector<8xf32> to vector<8x1xf32>
    %53 = arith.addf %40, %52 : vector<8x1xf32>
    %c0_34 = arith.constant 0 : index
    %54 = memref.load %arg5[%c0_34] : memref<1xf32, #tpu.memory_space<smem>>
    %55 = vector.broadcast %54 : f32 to vector<8x1xf32>
    %56 = arith.addf %53, %55 : vector<8x1xf32>
    %57 = tpu.transpose %56, [1, 0] : vector<8x1xf32> -> vector<1x8xf32>
    %c0_35 = arith.constant 0 : index
    %c0_36 = arith.constant 0 : index
    %c0_37 = arith.constant 0 : index
    %58 = vector.load %arg6[%c0_35, %c0_36, %c0_37] : memref<1x1x8xf32, #tpu.memory_space<vmem>>, vector<1x1x8xf32>
    %59 = vector.shape_cast %58 : vector<1x1x8xf32> to vector<1x8xf32>
    %60 = vector.shape_cast %57 : vector<1x8xf32> to vector<1x1x8xf32>
    tpu.vector_store %arg6[%c0_35, %c0_36, %c0_37], %60 {strides = array<i32>} : memref<1x1x8xf32, #tpu.memory_space<vmem>>, vector<1x1x8xf32>,
    return
  }
  func.func @transform_0(%arg0: i32) -> (i32, i32) {
    %c0_i32 = arith.constant 0 : i32
    %c0_i32_0 = arith.constant 0 : i32
    return %arg0, %c0_i32 : i32, i32
  }
  func.func @transform_1(%arg0: i32) -> (i32, i32) {
    %c0_i32 = arith.constant 0 : i32
    %c0_i32_0 = arith.constant 0 : i32
    %c0_i32_1 = arith.constant 0 : i32
    return %c0_i32, %c0_i32_0 : i32, i32
  }
  func.func @transform_2(%arg0: i32) -> (i32, i32) {
    %c0_i32 = arith.constant 0 : i32
    %c0_i32_0 = arith.constant 0 : i32
    %c0_i32_1 = arith.constant 0 : i32
    return %c0_i32, %c0_i32_0 : i32, i32
  }
  func.func @transform_3(%arg0: i32) -> (i32, i32) {
    %c0_i32 = arith.constant 0 : i32
    %c0_i32_0 = arith.constant 0 : i32
    %c0_i32_1 = arith.constant 0 : i32
    return %c0_i32, %c0_i32_0 : i32, i32
  }
  func.func @transform_4(%arg0: i32) -> i32 {
    %c0_i32 = arith.constant 0 : i32
    %c0_i32_0 = arith.constant 0 : i32
    return %c0_i32 : i32
  }
  func.func @transform_5(%arg0: i32) -> (i32, i32, i32) {
    %c0_i32 = arith.constant 0 : i32
    %c0_i32_0 = arith.constant 0 : i32
    %c0_i32_1 = arith.constant 0 : i32
    return %arg0, %c0_i32, %c0_i32_0 : i32, i32, i32
  }
}

</mosaic_0001>

<llo_original>
// kernel: tpu_custom_call.1
$region0: #{tpu_custom_call.1}
  #allocation0 [shape = 'u32[]', space=smem, size = 0x4, offset = 0x4, fixed_abs, tag = 'smem constant byte address 0x4 - core index']
  #allocation1 [shape = 'u32[72,128]{1,0:T(1,128)}', space=vmem, size = 0x9000, scoped, tag = 'internal scratch']
  #allocation2 [shape = 'f32[1]{0:T(128)S(6)}', space=smem, size = 0x200, scoped, tag = 'scoped memory for tpu_custom_call.1']
  %s0 = inlined_call_operand.hbm [shape: f32[8,16], index: 0, kind: input, shape index: {}]
  %s1 = inlined_call_operand.hbm [shape: f32[16,512], index: 1, kind: input, shape index: {}]
  %s2 = inlined_call_operand.hbm [shape: f32[1,512], index: 2, kind: input, shape index: {}]
  %s3 = inlined_call_operand.vmem [shape: f32[1,512], index: 3, kind: input, shape index: {}]
  %s4 = inlined_call_operand.<no memory space> [shape: f32[1], index: 4, kind: input, shape index: {}]
  %s5 = inlined_call_operand.hbm [shape: f32[1,1,8], index: 5, kind: output, shape index: {}]
  %s6 = sld [smem:[#allocation0]]
  $region42: #{tpu_custom_call.1} parent=0
    _
  %s8 = ssub.s32 1, %s6
  %s9 = scalar_select 0, %s8, %s6
  %10 = sst [smem:[#allocation2]] %s4
  $region1: #{tpu_custom_call.1} parent=0
    #allocation3 [shape = 'u8[4096]{0}', space=vmem, size = 0x1000, scoped, tag = 'input window, operand 0, single buffered']
    #allocation4 [shape = 's32[1]{0}', space=sflag, size = 0x4, scoped, tag = 'scoped memory for tpu_custom_call.1']
    #allocation5 [shape = 's32[1]{0}', space=sflag, size = 0x4, scoped, tag = 'scoped memory for tpu_custom_call.1']
    #allocation6 [shape = 'u8[32768]{0}', space=vmem, size = 0x8000, scoped, tag = 'input window, operand 1, single buffered']
    #allocation7 [shape = 's32[1]{0}', space=sflag, size = 0x4, scoped, tag = 'scoped memory for tpu_custom_call.1']
    #allocation8 [shape = 'u8[2048]{0}', space=vmem, size = 0x800, scoped, tag = 'input window, operand 2, single buffered']
    #allocation9 [shape = 'u8[512]{0}', space=vmem, size = 0x400, scoped, tag = 'output window, operand 0, single buffered']
    %11 = vsyncpa [#allocation4], 0
    %12 = vsyncpa [#allocation7], 0
    %13 = vsyncpa [#allocation5], 0
    // Predicated region
    $region2: #{tpu_custom_call.1} parent=1 // pred_check
      _
    $region3: #{tpu_custom_call.1} parent=1 // pred_check_branch
      %15 = sbr.rel (0) target = $region5
    $region4: #{tpu_custom_call.1} parent=1 // pred_region
      %17 = vsyncadd [#allocation4], 0
      %s19 = sshll.u32 %s0, 4
      %s20 = int_to_ptr.hbm [resolvable:$true] %s19
      %s21 = sshll.u32 [#allocation3], 4
      %s22 = int_to_ptr.vmem [resolvable:$true] %s21
      %24 = dma.hbm_to_vmem [thread:$0]  %s20, 128, %s22, [#allocation4]
    $region5: #{tpu_custom_call.1} parent=1 // pred_fallthru
      _
    // Predicated region
    $region6: #{tpu_custom_call.1} parent=1 // pred_check
      _
    $region7: #{tpu_custom_call.1} parent=1 // pred_check_branch
      %26 = sbr.rel (0) target = $region9
    $region8: #{tpu_custom_call.1} parent=1 // pred_region
      %28 = vsyncadd [#allocation7], 0
      %s29 = sshll.u32 %s1, 4
      %s30 = int_to_ptr.hbm [resolvable:$true] %s29
      %s31 = sshll.u32 [#allocation6], 4
      %s32 = int_to_ptr.vmem [resolvable:$true] %s31
      %37 = dma.hbm_to_vmem [thread:$0]  %s30, 1024, %s32, [#allocation7], 512, 512, 32
    $region9: #{tpu_custom_call.1} parent=1 // pred_fallthru
      _
    // Predicated region
    $region10: #{tpu_custom_call.1} parent=1 // pred_check
      _
    $region11: #{tpu_custom_call.1} parent=1 // pred_check_branch
      %39 = sbr.rel (0) target = $region13
    $region12: #{tpu_custom_call.1} parent=1 // pred_region
      %41 = vsyncadd [#allocation7], 0
      %s43 = sshll.u32 %s2, 4
      %s44 = int_to_ptr.hbm [resolvable:$true] %s43
      %s45 = sshll.u32 [#allocation8], 4
      %s46 = int_to_ptr.vmem [resolvable:$true] %s45
      %48 = dma.hbm_to_vmem [thread:$0]  %s44, 64, %s46, [#allocation7]
    $region13: #{tpu_custom_call.1} parent=1 // pred_fallthru
      _
    // Predicated region
    $region14: #{tpu_custom_call.1} parent=1 // pred_check
      _
    $region15: #{tpu_custom_call.1} parent=1 // pred_check_branch
      %50 = sbr.rel (0) target = $region17
    $region16: #{tpu_custom_call.1} parent=1 // pred_region
      _
    $region17: #{tpu_custom_call.1} parent=1 // pred_fallthru
      _
    // Predicated region
    $region18: #{tpu_custom_call.1} parent=1 // pred_check
      _
    $region19: #{tpu_custom_call.1} parent=1 // pred_check_branch
      %52 = sbr.rel (0) target = $region21
    $region20: #{tpu_custom_call.1} parent=1 // pred_region
      _
    $region21: #{tpu_custom_call.1} parent=1 // pred_fallthru
      _
    // Predicated region
    $region22: #{tpu_custom_call.1} parent=1 // pred_check
      _
    $region23: #{tpu_custom_call.1} parent=1 // pred_check_branch
      %54 = sbr.rel (0) target = $region25
    $region24: #{tpu_custom_call.1} parent=1 // pred_region
      %56 = dma.done [#allocation4], 128
    $region25: #{tpu_custom_call.1} parent=1 // pred_fallthru
      _
    // Predicated region
    $region26: #{tpu_custom_call.1} parent=1 // pred_check
      _
    $region27: #{tpu_custom_call.1} parent=1 // pred_check_branch
      %58 = sbr.rel (0) target = $region29
    $region28: #{tpu_custom_call.1} parent=1 // pred_region
      %60 = dma.done [#allocation7], 1024
    $region29: #{tpu_custom_call.1} parent=1 // pred_fallthru
      _
    // Predicated region
    $region30: #{tpu_custom_call.1} parent=1 // pred_check
      _
    $region31: #{tpu_custom_call.1} parent=1 // pred_check_branch
      %62 = sbr.rel (0) target = $region33
    $region32: #{tpu_custom_call.1} parent=1 // pred_region
      %64 = dma.done [#allocation7], 64
    $region33: #{tpu_custom_call.1} parent=1 // pred_fallthru
      _
    %v65 = vld [vmem:[#allocation3] sm:$0xff]
    %v66 = vld [vmem:[#allocation6] sm:$0xff]
    %v67 = vld [vmem:[#allocation6 + $0x20] sm:$0xff]
    %v68 = vld [vmem:[#allocation8] sm:$0x1]
    %v70 = vperm.slane %v68, 0
    %vm72 = vcmask 130048
    %v74 = vsel %vm72, %v65, 0
    %76 = vmatpush.msra.mxu0 0.0
    %77 = vmatpush.msra.mxu0 0.0
    %78 = vmatpush.msra.mxu0 0.0
    %79 = vmatpush.msra.mxu0 0.0
    %80 = vmatpush.msra.mxu0 0.0
    %81 = vmatpush.msra.mxu0 0.0
    %82 = vmatpush.msra.mxu0 0.0
    %83 = vmatpush.msra.mxu0 0.0
    %84 = vmatpush.msra.mxu0 0.0
    %85 = vmatpush.msra.mxu0 0.0
    %86 = vmatpush.msra.mxu0 0.0
    %87 = vmatpush.msra.mxu0 0.0
    %88 = vmatpush.msra.mxu0 0.0
    %89 = vmatpush.msra.mxu0 0.0
    %90 = vmatpush.msra.mxu0 %v67
    %91 = vmatpush.msra.mxu0 %v66
    %92 = vmatmul.f32.gmra.mxu0 %v74
    %v93 = vpop.f32.mrf.mxu0
    %v94 = vadd.f32 %v70, %v93
    %95 = vdwg.mxu0
    %v96 = vmax.f32 %v94, 0.0
    %v97 = vld [vmem:[%s3] sm:$0x1]
    %v99 = vperm.slane %v97, 0
    %v101 = vmul.f32 %v96, %v99
    %102 = vadd.xlane.f32.xlu0 %v101
    %v103 = vpop.xlane.xlu0 %102
    %v104 = vadd.f32 %v103, 0.0
    %v105 = vld [vmem:[#allocation6 + $0x8] sm:$0xff]
    %v106 = vld [vmem:[#allocation6 + $0x28] sm:$0xff]
    %v107 = vld [vmem:[#allocation8 + $0x1] sm:$0x1]
    %v109 = vperm.slane %v107, 0
    %111 = vmatpush.msra.mxu0 0.0
    %112 = vmatpush.msra.mxu0 0.0
    %113 = vmatpush.msra.mxu0 0.0
    %114 = vmatpush.msra.mxu0 0.0
    %115 = vmatpush.msra.mxu0 0.0
    %116 = vmatpush.msra.mxu0 0.0
    %117 = vmatpush.msra.mxu0 0.0
    %118 = vmatpush.msra.mxu0 0.0
    %119 = vmatpush.msra.mxu0 0.0
    %120 = vmatpush.msra.mxu0 0.0
    %121 = vmatpush.msra.mxu0 0.0
    %122 = vmatpush.msra.mxu0 0.0
    %123 = vmatpush.msra.mxu0 0.0
    %124 = vmatpush.msra.mxu0 0.0
    %125 = vmatpush.msra.mxu0 %v106
    %126 = vmatpush.msra.mxu0 %v105
    %127 = vmatmul.f32.gmra.mxu0 %v74
    %v128 = vpop.f32.mrf.mxu0
    %v129 = vadd.f32 %v109, %v128
    %130 = vdwg.mxu0
    %v131 = vmax.f32 %v129, 0.0
    %v132 = vld [vmem:[%s3 + $0x1] sm:$0x1]
    %v134 = vperm.slane %v132, 0
    %v136 = vmul.f32 %v131, %v134
    %137 = vadd.xlane.f32.xlu0 %v136
    %v138 = vpop.xlane.xlu0 %137
    %v139 = vadd.f32 %v104, %v138
    %v140 = vld [vmem:[#allocation6 + $0x10] sm:$0xff]
    %v141 = vld [vmem:[#allocation6 + $0x30] sm:$0xff]
    %v142 = vld [vmem:[#allocation8 + $0x2] sm:$0x1]
    %v144 = vperm.slane %v142, 0
    %146 = vmatpush.msra.mxu0 0.0
    %147 = vmatpush.msra.mxu0 0.0
    %148 = vmatpush.msra.mxu0 0.0
    %149 = vmatpush.msra.mxu0 0.0
    %150 = vmatpush.msra.mxu0 0.0
    %151 = vmatpush.msra.mxu0 0.0
    %152 = vmatpush.msra.mxu0 0.0
    %153 = vmatpush.msra.mxu0 0.0
    %154 = vmatpush.msra.mxu0 0.0
    %155 = vmatpush.msra.mxu0 0.0
    %156 = vmatpush.msra.mxu0 0.0
    %157 = vmatpush.msra.mxu0 0.0
    %158 = vmatpush.msra.mxu0 0.0
    %159 = vmatpush.msra.mxu0 0.0
    %160 = vmatpush.msra.mxu0 %v141
    %161 = vmatpush.msra.mxu0 %v140
    %162 = vmatmul.f32.gmra.mxu0 %v74
    %v163 = vpop.f32.mrf.mxu0
    %v164 = vadd.f32 %v144, %v163
    %165 = vdwg.mxu0
    %v166 = vmax.f32 %v164, 0.0
    %v167 = vld [vmem:[%s3 + $0x2] sm:$0x1]
    %v169 = vperm.slane %v167, 0
    %v171 = vmul.f32 %v166, %v169
    %172 = vadd.xlane.f32.xlu0 %v171
    %v173 = vpop.xlane.xlu0 %172
    %v174 = vadd.f32 %v139, %v173
    %v175 = vld [vmem:[#allocation6 + $0x18] sm:$0xff]
    %v176 = vld [vmem:[#allocation6 + $0x38] sm:$0xff]
    %v177 = vld [vmem:[#allocation8 + $0x3] sm:$0x1]
    %v179 = vperm.slane %v177, 0
    %181 = vmatpush.msra.mxu0 0.0
    %182 = vmatpush.msra.mxu0 0.0
    %183 = vmatpush.msra.mxu0 0.0
    %184 = vmatpush.msra.mxu0 0.0
    %185 = vmatpush.msra.mxu0 0.0
    %186 = vmatpush.msra.mxu0 0.0
    %187 = vmatpush.msra.mxu0 0.0
    %188 = vmatpush.msra.mxu0 0.0
    %189 = vmatpush.msra.mxu0 0.0
    %190 = vmatpush.msra.mxu0 0.0
    %191 = vmatpush.msra.mxu0 0.0
    %192 = vmatpush.msra.mxu0 0.0
    %193 = vmatpush.msra.mxu0 0.0
    %194 = vmatpush.msra.mxu0 0.0
    %195 = vmatpush.msra.mxu0 %v176
    %196 = vmatpush.msra.mxu0 %v175
    %197 = vmatmul.f32.gmra.mxu0 %v74
    %v198 = vpop.f32.mrf.mxu0
    %v199 = vadd.f32 %v179, %v198
    %200 = vdwg.mxu0
    %v201 = vmax.f32 %v199, 0.0
    %v202 = vld [vmem:[%s3 + $0x3] sm:$0x1]
    %v204 = vperm.slane %v202, 0
    %v206 = vmul.f32 %v201, %v204
    %207 = vadd.xlane.f32.xlu0 %v206
    %v208 = vpop.xlane.xlu0 %207
    %v209 = vadd.f32 %v174, %v208
    %s210 = sld [smem:[#allocation2]]
    %v211 = vstv %s210
    %v212 = vadd.f32 %v209, %v211
    %213 = vxpose.xlu0.b32.start [1/16] %v212, 128
    %214 = vxpose.xlu0.b32.cont [2/16] 0.0, 128
    %215 = vxpose.xlu0.b32.cont [3/16] 0.0, 128
    %216 = vxpose.xlu0.b32.cont [4/16] 0.0, 128
    %217 = vxpose.xlu0.b32.cont [5/16] 0.0, 128
    %218 = vxpose.xlu0.b32.cont [6/16] 0.0, 128
    %219 = vxpose.xlu0.b32.cont [7/16] 0.0, 128
    %220 = vxpose.xlu0.b32.cont [8/16] 0.0, 128
    %221 = vxpose.xlu0.b32.cont [9/16] 0.0, 128
    %222 = vxpose.xlu0.b32.cont [10/16] 0.0, 128
    %223 = vxpose.xlu0.b32.cont [11/16] 0.0, 128
    %224 = vxpose.xlu0.b32.cont [12/16] 0.0, 128
    %225 = vxpose.xlu0.b32.cont [13/16] 0.0, 128
    %226 = vxpose.xlu0.b32.cont [14/16] 0.0, 128
    %227 = vxpose.xlu0.b32.cont [15/16] 0.0, 128
    %228 = vxpose.xlu0.b32.end [16/16] 0.0, 128
    %v229 = vpop.trf.xlu0
    %v230 = vpop.trf.xlu0
    %v231 = vpop.trf.xlu0
    %v232 = vpop.trf.xlu0
    %v233 = vpop.trf.xlu0
    %v234 = vpop.trf.xlu0
    %v235 = vpop.trf.xlu0
    %v236 = vpop.trf.xlu0
    %v237 = vpop.trf.xlu0
    %v238 = vpop.trf.xlu0
    %v239 = vpop.trf.xlu0
    %v240 = vpop.trf.xlu0
    %v241 = vpop.trf.xlu0
    %v242 = vpop.trf.xlu0
    %v243 = vpop.trf.xlu0
    %v244 = vpop.trf.xlu0
    %vm245 = vcmask 57344
    %246 = vst.msk [vmem:[#allocation9] sm:$0x1] %vm245, %v229
    // Predicated region
    $region34: #{tpu_custom_call.1} parent=1 // pred_check
      _
    $region35: #{tpu_custom_call.1} parent=1 // pred_check_branch
      %248 = sbr.rel (0) target = $region37
    $region36: #{tpu_custom_call.1} parent=1 // pred_region
      %250 = vsyncadd [#allocation5], 0
      %s252 = sshll.u32 [#allocation9], 4
      %s253 = int_to_ptr.vmem [resolvable:$true] %s252
      %s254 = sshll.u32 %s5, 4
      %s255 = int_to_ptr.hbm [resolvable:$true] %s254
      %257 = dma.vmem_to_hbm [thread:$0]  %s253, 16, %s255, [#allocation5]
    $region37: #{tpu_custom_call.1} parent=1 // pred_fallthru
      _
    // Predicated region
    $region38: #{tpu_custom_call.1} parent=1 // pred_check
      _
    $region39: #{tpu_custom_call.1} parent=1 // pred_check_branch
      %259 = sbr.rel (0) target = $region41
    $region40: #{tpu_custom_call.1} parent=1 // pred_region
      %261 = dma.done [#allocation5], 16
    $region41: #{tpu_custom_call.1} parent=1 // pred_fallthru
      _
    %262 = vsyncpa [#allocation4], 1
    %263 = vsyncpa [#allocation7], 1
    %264 = vsyncpa [#allocation5], 1

</llo_original>
